<compile_context>
chip_gen: v5e
topology: v5e:2x2
jax: 0.10.0
libtpu: 0.0.40
codegen_flags: <defaults>
</compile_context>

<pallas_src>
import functools

import jax
import jax.numpy as jnp
from jax import lax
from jax.experimental import pallas as pl
from jax.experimental.pallas import tpu as pltpu

_VMEM_LIMIT = 48 * 1024 * 1024


def _round_up(x, m):
    return ((x + m - 1) // m) * m


# ----------------------------------------------------------------------------
# Kernel 1: dense / linear layer  y = x @ W^T (+ b)
#   Whole-K, weight-resident: x block (TM, Cin) bf16, W block (TN, Cin) bf16,
#   single MXU pass per grid step with f32 accumulation, direct store.
# ----------------------------------------------------------------------------
def _linear_kernel(x_ref, w_ref, o_ref):
    o_ref[...] = lax.dot_general(
        x_ref[...], w_ref[...],
        dimension_numbers=(((1,), (1,)), ((), ())),   # contract Cin with Cin
        preferred_element_type=jnp.float32,
    ).astype(o_ref.dtype)


def _linear_bias_kernel(x_ref, w_ref, b_ref, o_ref):
    acc = lax.dot_general(
        x_ref[...], w_ref[...],
        dimension_numbers=(((1,), (1,)), ((), ())),
        preferred_element_type=jnp.float32,
    )
    o_ref[...] = (acc + b_ref[...]).astype(o_ref.dtype)


def linear(x2d, w, bias=None, *, out_dtype=None, tm=256):
    """x2d: (R, Cin), w: (Cout, Cin) [nn.Linear layout], bias: (Cout,) or None.

    bf16 MXU operands, f32 accumulation, output in `out_dtype`.
    """
    R, Cin = x2d.shape
    Cout, Cin_w = w.shape
    assert Cin == Cin_w
    out_dtype = out_dtype or x2d.dtype

    # Feed the MXU bf16 operands (accumulation stays f32 in-kernel).
    xb = x2d.astype(jnp.bfloat16)
    wb = w.astype(jnp.bfloat16)

    # Row (M) tile: pad rows up to a healthy MXU tile instead of requiring an
    # exact divisor (fixes the TM->8 collapse for R = B*197 token counts).
    TM = min(tm, _round_up(R, 8))
    R_pad = _round_up(R, TM)
    if R_pad != R:
        xb = jnp.pad(xb, ((0, R_pad - R), (0, 0)))

    # Output channels: lane-align; keep the whole weight resident when it fits
    # (ViT-sized weights do), otherwise tile Cout in 256-aligned chunks.
    Cout_pad = _round_up(Cout, 128)
    if Cout_pad * Cin * 2 <= 6 * 1024 * 1024:
        TN = Cout_pad
    else:
        TN = 512
        Cout_pad = _round_up(Cout, TN)
    if Cout_pad != Cout:
        wb = jnp.pad(wb, ((0, Cout_pad - Cout), (0, 0)))

    grid = (R_pad // TM, Cout_pad // TN)
    x_spec = pl.BlockSpec((TM, Cin), lambda i, j: (i, 0))
    w_spec = pl.BlockSpec((TN, Cin), lambda i, j: (j, 0))
    o_spec = pl.BlockSpec((TM, TN), lambda i, j: (i, j))
    cparams = pltpu.CompilerParams(
        dimension_semantics=("parallel", "parallel"),
        vmem_limit_bytes=_VMEM_LIMIT)
    out_shape = jax.ShapeDtypeStruct((R_pad, Cout_pad), out_dtype)

    # TODO(synk): for Cin >> ~2K, add a K grid axis with an f32 VMEM
    # accumulator; ViT channel counts fit whole-K comfortably.
    if bias is None:
        y = pl.pallas_call(
            _linear_kernel, out_shape=out_shape, grid=grid,
            in_specs=[x_spec, w_spec], out_specs=o_spec,
            compiler_params=cparams,
        )(xb, wb)
    else:
        b2d = bias.reshape(1, Cout).astype(jnp.float32)
        if Cout_pad != Cout:
            b2d = jnp.pad(b2d, ((0, 0), (0, Cout_pad - Cout)))
        b_spec = pl.BlockSpec((1, TN), lambda i, j: (0, j))
        y = pl.pallas_call(
            _linear_bias_kernel, out_shape=out_shape, grid=grid,
            in_specs=[x_spec, w_spec, b_spec], out_specs=o_spec,
            compiler_params=cparams,
        )(xb, wb, b2d)

    if R_pad != R or Cout_pad != Cout:
        y = y[:R, :Cout]
    return y


# ----------------------------------------------------------------------------
# Kernel 2: multi-head self-attention on the packed bf16 qkv layout.
#   grid = (batch, query-row tile); q view delivers a (TQ, 3*inner) row tile,
#   kv view delivers the full (N, 3*inner) block (DMA'd once per batch since
#   its block index is constant over the inner grid axis).
# ----------------------------------------------------------------------------
def _mhsa_kernel(q_rows_ref, kv_rows_ref, o_ref, *, num_head, dim_head, scale):
    inner = num_head * dim_head
    q_rows = q_rows_ref[0]                       # (TQ, 3*inner), one load
    kv_rows = kv_rows_ref[0]                     # (N,  3*inner), one load
    scale_c = jnp.asarray(scale, q_rows.dtype)

    # TODO(synk): grid-level head separation (head-major qkv layout) would
    # remove these sub-vreg lane slices; kept in-kernel to stay on one big,
    # MXU-efficient qkv GEMM upstream.
    for h in range(num_head):
        lo = h * dim_head
        # Fold scale into q (TQ x D VPU work instead of TQ x N).
        q = q_rows[:, lo:lo + dim_head] * scale_c                      # (TQ, D)
        k = kv_rows[:, inner + lo:inner + lo + dim_head]               # (N, D)
        v = kv_rows[:, 2 * inner + lo:2 * inner + lo + dim_head]       # (N, D)

        # q . k^T without materializing a transpose: contract D of both.
        s = lax.dot_general(
            q, k,
            dimension_numbers=(((1,), (1,)), ((), ())),
            preferred_element_type=jnp.float32)                        # (TQ, N) f32

        m = jnp.max(s, axis=-1, keepdims=True)
        p = jnp.exp(s - m)
        denom = jnp.sum(p, axis=-1, keepdims=True)
        out_h = jnp.dot(p.astype(v.dtype), v,
                        preferred_element_type=jnp.float32)            # (TQ, D) f32
        out_h = out_h / denom                                          # exact divide

        # Store this head directly into its output columns (no concatenate).
        o_ref[0, :, lo:lo + dim_head] = out_h.astype(o_ref.dtype)


def mhsa(qkv, *, num_head, dim_head, scale):
    """qkv: (B, N, 3*inner) bf16 -> out: (B, N, inner) bf16."""
    B, N, three_inner = qkv.shape
    inner = num_head * dim_head
    assert three_inner == 3 * inner

    TQ = min(128, _round_up(N, 8))
    n_q = pl.cdiv(N, TQ)

    kernel = functools.partial(
        _mhsa_kernel, num_head=num_head, dim_head=dim_head, scale=scale)
    return pl.pallas_call(
        kernel,
        out_shape=jax.ShapeDtypeStruct((B, N, inner), qkv.dtype),
        grid=(B, n_q),
        in_specs=[
            pl.BlockSpec((1, TQ, three_inner), lambda b, qt: (b, qt, 0)),  # Q rows
            pl.BlockSpec((1, N, three_inner), lambda b, qt: (b, 0, 0)),    # K/V rows
        ],
        out_specs=pl.BlockSpec((1, TQ, inner), lambda b, qt: (b, qt, 0)),
        compiler_params=pltpu.CompilerParams(
            dimension_semantics=("parallel", "parallel"),
            vmem_limit_bytes=_VMEM_LIMIT),
    )(qkv, qkv)


# ----------------------------------------------------------------------------
# Module forward: Pallas for the two linears and the attention core; only
# view reshapes / cheap pads remain in the wrapper.
# ----------------------------------------------------------------------------
def attention_forward(x, params, *, num_head, dim_head, qk_scale=None):
    B, N, C = x.shape
    inner = num_head * dim_head
    scale = qk_scale or dim_head ** (-0.5)

    # to_qkv: Linear(dim, 3*inner, bias=False); qkv kept in bf16.
    x2d = x.reshape(B * N, C)
    qkv = linear(x2d, params["w_qkv"], bias=None, out_dtype=jnp.bfloat16)
    qkv = qkv.reshape(B, N, 3 * inner)

    # Attention core on the packed layout; output already 'b n (h d)'.
    out = mhsa(qkv, num_head=num_head, dim_head=dim_head, scale=scale)

    # proj_out: Linear(inner, dim) + Dropout(0.0) == identity, unless the
    # module degenerates to nn.Identity (num_head == 1 and dim_head == dim).
    if params.get("w_proj") is None:
        return out.reshape(B, N, inner).astype(x.dtype)
    proj = linear(out.reshape(B * N, inner), params["w_proj"],
                  bias=params["b_proj"], out_dtype=x.dtype)
    return proj.reshape(B, N, C)


# ----------------------------------------------------------------------------
# Pure-JAX f32 reference matching the PyTorch module (qkv_bias=False)
# ----------------------------------------------------------------------------
def attention_reference(x, params, *, num_head, dim_head):
    B, N, C = x.shape
    inner = num_head * dim_head
    scale = dim_head ** (-0.5)
    qkv = x @ params["w_qkv"].T
    q, k, v = jnp.split(qkv, 3, axis=-1)

    def to_heads(t):  # 'b n (h d) -> b h n d'
        return t.reshape(B, N, num_head, dim_head).transpose(0, 2, 1, 3)

    q, k, v = map(to_heads, (q, k, v))
    dots = jnp.einsum("bhnd,bhmd->bhnm", q, k) * scale
    attn = jax.nn.softmax(dots, axis=-1)
    out = jnp.einsum("bhnm,bhmd->bhnd", attn, v)
    out = out.transpose(0, 2, 1, 3).reshape(B, N, inner)
    return out @ params["w_proj"].T + params["b_proj"]


if __name__ == "__main__":
    # Small shapes consistent with the module.
    B, N, dim = 2, 8, 32
    num_head, dim_head = 4, 16
    inner = num_head * dim_head

    key = jax.random.PRNGKey(0)
    kx, kw1, kw2, kb2 = jax.random.split(key, 4)

    x = jax.random.normal(kx, (B, N, dim), dtype=jnp.float32)

    # nn.Linear layout: (out_features, in_features).
    params = {
        "w_qkv": jax.random.normal(kw1, (3 * inner, dim), jnp.float32) * 0.05,
        "w_proj": jax.random.normal(kw2, (dim, inner), jnp.float32) * 0.05,
        "b_proj": jax.random.normal(kb2, (dim,), jnp.float32) * 0.05,
    }

    y = attention_forward(x, params, num_head=num_head, dim_head=dim_head)
    y = jax.block_until_ready(y)

    y_ref = attention_reference(x, params, num_head=num_head, dim_head=dim_head)
    assert y.shape == (B, N, dim)
    # Tolerance accounts for bf16 MXU operands (f32 accumulation) vs. the
    # full-f32 reference.
    assert jnp.allclose(y, y_ref, atol=3e-2, rtol=3e-2), (
        float(jnp.max(jnp.abs(y - y_ref))))

    print("KERNEL_OK")
</pallas_src>

<mosaic_0001>
module attributes {stable_mosaic.version = 11 : i64} {
  func.func @_linear_kernel(%arg0: i32, %arg1: i32, %arg2: memref<16x32xbf16, #tpu.memory_space<vmem>>, %arg3: memref<256x32xbf16, #tpu.memory_space<vmem>>, %arg4: memref<16x256xbf16, #tpu.memory_space<vmem>>) attributes {dimension_semantics = [#tpu.dimension_semantics<parallel>, #tpu.dimension_semantics<parallel>], iteration_bounds = array<i64: 1, 1>, scalar_prefetch = 0 : i64, scratch_operands = 0 : i64, tpu.core_type = #tpu.core_type<tc>, window_params = [{transform_indices = @transform_0, window_bounds = array<i64: 16, 32>}, {transform_indices = @transform_1, window_bounds = array<i64: 256, 32>}, {transform_indices = @transform_2, window_bounds = array<i64: 16, 256>}]} {
    %c0 = arith.constant 0 : index
    %c0_0 = arith.constant 0 : index
    %0 = vector.load %arg2[%c0, %c0_0] : memref<16x32xbf16, #tpu.memory_space<vmem>>, vector<16x32xbf16>
    %c0_1 = arith.constant 0 : index
    %c0_2 = arith.constant 0 : index
    %1 = vector.load %arg3[%c0_1, %c0_2] : memref<256x32xbf16, #tpu.memory_space<vmem>>, vector<256x32xbf16>
    %cst = arith.constant dense<0.000000e+00> : vector<16x256xf32>
    %2 = tpu.matmul %0, %1, %cst {dimension_numbers = #tpu.dot_dimension_numbers<[1], [1], [0], [0], [0, 0, 1, 0], [], []>} : vector<16x32xbf16>, vector<256x32xbf16>, vector<16x256xf32> -> vector<16x256xf32>
    %3 = arith.truncf %2 : vector<16x256xf32> to vector<16x256xbf16>
    %c0_3 = arith.constant 0 : index
    %c0_4 = arith.constant 0 : index
    %4 = vector.load %arg4[%c0_3, %c0_4] : memref<16x256xbf16, #tpu.memory_space<vmem>>, vector<16x256xbf16>
    tpu.vector_store %arg4[%c0_3, %c0_4], %3 {strides = array<i32>} : memref<16x256xbf16, #tpu.memory_space<vmem>>, vector<16x256xbf16>,
    return
  }
  func.func @transform_0(%arg0: i32, %arg1: i32) -> (i32, i32) {
    %c0_i32 = arith.constant 0 : i32
    %c0_i32_0 = arith.constant 0 : i32
    return %arg0, %c0_i32 : i32, i32
  }
  func.func @transform_1(%arg0: i32, %arg1: i32) -> (i32, i32) {
    %c0_i32 = arith.constant 0 : i32
    %c0_i32_0 = arith.constant 0 : i32
    return %arg1, %c0_i32 : i32, i32
  }
  func.func @transform_2(%arg0: i32, %arg1: i32) -> (i32, i32) {
    %c0_i32 = arith.constant 0 : i32
    return %arg0, %arg1 : i32, i32
  }
}

</mosaic_0001>

<llo_original>
// kernel: tpu_custom_call.1
$region0: #{tpu_custom_call.1}
  #allocation0 [shape = 'u32[]', space=smem, size = 0x4, offset = 0x4, fixed_abs, tag = 'smem constant byte address 0x4 - core index']
  #allocation1 [shape = 'u32[72,128]{1,0:T(1,128)}', space=vmem, size = 0x9000, scoped, tag = 'internal scratch']
  %s0 = inlined_call_operand.vmem [shape: bf16[16,32], index: 0, kind: input, shape index: {}]
  %s1 = inlined_call_operand.vmem [shape: bf16[256,32], index: 1, kind: input, shape index: {}]
  %s2 = inlined_call_operand.hbm [shape: bf16[16,256], index: 2, kind: output, shape index: {}]
  %s3 = sld [smem:[#allocation0]]
  $region18: #{tpu_custom_call.1} parent=0
    _
  %s5 = ssub.s32 1, %s3
  %s6 = scalar_select 0, %s5, %s3
  $region1: #{tpu_custom_call.1} parent=0
    #allocation2 [shape = 'u8[8192]{0}', space=vmem, size = 0x2000, scoped, tag = 'output window, operand 0, single buffered']
    #allocation3 [shape = 's32[1]{0}', space=sflag, size = 0x4, scoped, tag = 'scoped memory for tpu_custom_call.1']
    %7 = vsyncpa [#allocation3], 0
    // Predicated region
    $region2: #{tpu_custom_call.1} parent=1 // pred_check
      _
    $region3: #{tpu_custom_call.1} parent=1 // pred_check_branch
      %9 = sbr.rel (0) target = $region5
    $region4: #{tpu_custom_call.1} parent=1 // pred_region
      _
    $region5: #{tpu_custom_call.1} parent=1 // pred_fallthru
      _
    // Predicated region
    $region6: #{tpu_custom_call.1} parent=1 // pred_check
      _
    $region7: #{tpu_custom_call.1} parent=1 // pred_check_branch
      %11 = sbr.rel (0) target = $region9
    $region8: #{tpu_custom_call.1} parent=1 // pred_region
      _
    $region9: #{tpu_custom_call.1} parent=1 // pred_fallthru
      _
    %v12 = vld [vmem:[%s0] sm:$0xf]
    %v13 = vld [vmem:[%s0 + $0x4] sm:$0xf]
    %v14 = vld [vmem:[%s1] sm:$0xf]
    %v15 = vld [vmem:[%s1 + $0x4] sm:$0xf]
    %v16 = vld [vmem:[%s1 + $0x8] sm:$0xf]
    %v17 = vld [vmem:[%s1 + $0xc] sm:$0xf]
    %v18 = vld [vmem:[%s1 + $0x10] sm:$0xf]
    %v19 = vld [vmem:[%s1 + $0x14] sm:$0xf]
    %v20 = vld [vmem:[%s1 + $0x18] sm:$0xf]
    %v21 = vld [vmem:[%s1 + $0x1c] sm:$0xf]
    %v22 = vld [vmem:[%s1 + $0x20] sm:$0xf]
    %v23 = vld [vmem:[%s1 + $0x24] sm:$0xf]
    %v24 = vld [vmem:[%s1 + $0x28] sm:$0xf]
    %v25 = vld [vmem:[%s1 + $0x2c] sm:$0xf]
    %v26 = vld [vmem:[%s1 + $0x30] sm:$0xf]
    %v27 = vld [vmem:[%s1 + $0x34] sm:$0xf]
    %v28 = vld [vmem:[%s1 + $0x38] sm:$0xf]
    %v29 = vld [vmem:[%s1 + $0x3c] sm:$0xf]
    %v30 = vld [vmem:[%s1 + $0x40] sm:$0xf]
    %v31 = vld [vmem:[%s1 + $0x44] sm:$0xf]
    %v32 = vld [vmem:[%s1 + $0x48] sm:$0xf]
    %v33 = vld [vmem:[%s1 + $0x4c] sm:$0xf]
    %v34 = vld [vmem:[%s1 + $0x50] sm:$0xf]
    %v35 = vld [vmem:[%s1 + $0x54] sm:$0xf]
    %v36 = vld [vmem:[%s1 + $0x58] sm:$0xf]
    %v37 = vld [vmem:[%s1 + $0x5c] sm:$0xf]
    %v38 = vld [vmem:[%s1 + $0x60] sm:$0xf]
    %v39 = vld [vmem:[%s1 + $0x64] sm:$0xf]
    %v40 = vld [vmem:[%s1 + $0x68] sm:$0xf]
    %v41 = vld [vmem:[%s1 + $0x6c] sm:$0xf]
    %v42 = vld [vmem:[%s1 + $0x70] sm:$0xf]
    %v43 = vld [vmem:[%s1 + $0x74] sm:$0xf]
    %v44 = vld [vmem:[%s1 + $0x78] sm:$0xf]
    %v45 = vld [vmem:[%s1 + $0x7c] sm:$0xf]
    %v48 = vunpack.c.l.b16 %v12
    %v49 = vunpack.c.l.b16 %v13
    %v50 = vpack.c.b16 %v49, %v48
    %v83 = vunpack.c.l.b16 %v14
    %v84 = vunpack.c.l.b16 %v15
    %v85 = vunpack.c.l.b16 %v16
    %v86 = vunpack.c.l.b16 %v17
    %v87 = vunpack.c.l.b16 %v18
    %v88 = vunpack.c.l.b16 %v19
    %v89 = vunpack.c.l.b16 %v20
    %v90 = vunpack.c.l.b16 %v21
    %v91 = vunpack.c.l.b16 %v22
    %v92 = vunpack.c.l.b16 %v23
    %v93 = vunpack.c.l.b16 %v24
    %v94 = vunpack.c.l.b16 %v25
    %v95 = vunpack.c.l.b16 %v26
    %v96 = vunpack.c.l.b16 %v27
    %v97 = vunpack.c.l.b16 %v28
    %v98 = vunpack.c.l.b16 %v29
    %v99 = vunpack.c.l.b16 %v30
    %v100 = vunpack.c.l.b16 %v31
    %v101 = vunpack.c.l.b16 %v32
    %v102 = vunpack.c.l.b16 %v33
    %v103 = vunpack.c.l.b16 %v34
    %v104 = vunpack.c.l.b16 %v35
    %v105 = vunpack.c.l.b16 %v36
    %v106 = vunpack.c.l.b16 %v37
    %v107 = vunpack.c.l.b16 %v38
    %v108 = vunpack.c.l.b16 %v39
    %v109 = vunpack.c.l.b16 %v40
    %v110 = vunpack.c.l.b16 %v41
    %v111 = vunpack.c.l.b16 %v42
    %v112 = vunpack.c.l.b16 %v43
    %v113 = vunpack.c.l.b16 %v44
    %v114 = vunpack.c.l.b16 %v45
    %v115 = vpack.c.b16 %v84, %v83
    %v116 = vpack.c.b16 %v86, %v85
    %v117 = vpack.c.b16 %v88, %v87
    %v118 = vpack.c.b16 %v90, %v89
    %v119 = vpack.c.b16 %v92, %v91
    %v120 = vpack.c.b16 %v94, %v93
    %v121 = vpack.c.b16 %v96, %v95
    %v122 = vpack.c.b16 %v98, %v97
    %v123 = vpack.c.b16 %v100, %v99
    %v124 = vpack.c.b16 %v102, %v101
    %v125 = vpack.c.b16 %v104, %v103
    %v126 = vpack.c.b16 %v106, %v105
    %v127 = vpack.c.b16 %v108, %v107
    %v128 = vpack.c.b16 %v110, %v109
    %v129 = vpack.c.b16 %v112, %v111
    %v130 = vpack.c.b16 %v114, %v113
    %vm131 = vcmask 261120
    %v133 = vsel %vm131, %v50, 0
    %v136 = vsel %vm131, %v115, 0
    %v139 = vsel %vm131, %v116, 0
    %v142 = vsel %vm131, %v117, 0
    %v145 = vsel %vm131, %v118, 0
    %v148 = vsel %vm131, %v119, 0
    %v151 = vsel %vm131, %v120, 0
    %v154 = vsel %vm131, %v121, 0
    %v157 = vsel %vm131, %v122, 0
    %v160 = vsel %vm131, %v123, 0
    %v163 = vsel %vm131, %v124, 0
    %v166 = vsel %vm131, %v125, 0
    %v169 = vsel %vm131, %v126, 0
    %v172 = vsel %vm131, %v127, 0
    %v175 = vsel %vm131, %v128, 0
    %v178 = vsel %vm131, %v129, 0
    %v181 = vsel %vm131, %v130, 0
    %183 = vmatpush.bf16.xpose.msra.mxu0 %v157
    %184 = vmatpush.bf16.xpose.msra.mxu0 %v154
    %185 = vmatpush.bf16.xpose.msra.mxu0 %v151
    %186 = vmatpush.bf16.xpose.msra.mxu0 %v148
    %187 = vmatpush.bf16.xpose.msra.mxu0 %v145
    %188 = vmatpush.bf16.xpose.msra.mxu0 %v142
    %189 = vmatpush.bf16.xpose.msra.mxu0 %v139
    %190 = vmatpush.bf16.xpose.msra.mxu0 %v136
    %191 = vmatmul.bf16.gmra.mxu0 %v133
    %v192 = vpop.f32.mrf.mxu0
    %v193 = vadd.f32 0.0, %v192
    %v194 = vpop.f32.mrf.mxu0
    %v195 = vadd.f32 0.0, %v194
    %196 = vdwg.mxu0
    %197 = vmatpush.bf16.xpose.msra.mxu0 %v181
    %198 = vmatpush.bf16.xpose.msra.mxu0 %v178
    %199 = vmatpush.bf16.xpose.msra.mxu0 %v175
    %200 = vmatpush.bf16.xpose.msra.mxu0 %v172
    %201 = vmatpush.bf16.xpose.msra.mxu0 %v169
    %202 = vmatpush.bf16.xpose.msra.mxu0 %v166
    %203 = vmatpush.bf16.xpose.msra.mxu0 %v163
    %204 = vmatpush.bf16.xpose.msra.mxu0 %v160
    %205 = vmatmul.bf16.gmra.mxu0 %v133
    %v206 = vpop.f32.mrf.mxu0
    %v207 = vadd.f32 0.0, %v206
    %v208 = vpop.f32.mrf.mxu0
    %v209 = vadd.f32 0.0, %v208
    %210 = vdwg.mxu0
    %v211 = vpack.c.bf16 %v207, %v193
    %v212 = vpack.c.bf16 %v209, %v195
    %213 = vst [vmem:[#allocation2] sm:$0xff] %v211
    %214 = vst [vmem:[#allocation2 + $0x8] sm:$0xff] %v212
    // Predicated region
    $region10: #{tpu_custom_call.1} parent=1 // pred_check
      _
    $region11: #{tpu_custom_call.1} parent=1 // pred_check_branch
      %216 = sbr.rel (0) target = $region13
    $region12: #{tpu_custom_call.1} parent=1 // pred_region
      %218 = vsyncadd [#allocation3], 0
      %s219 = sshll.u32 [#allocation2], 4
      %s220 = int_to_ptr.vmem [resolvable:$true] %s219
      %s221 = sshll.u32 %s2, 4
      %s222 = int_to_ptr.hbm [resolvable:$true] %s221
      %227 = dma.vmem_to_hbm [thread:$0]  %s220, 256, %s222, [#allocation3], 128, 128, 8
    $region13: #{tpu_custom_call.1} parent=1 // pred_fallthru
      _
    // Predicated region
    $region14: #{tpu_custom_call.1} parent=1 // pred_check
      _
    $region15: #{tpu_custom_call.1} parent=1 // pred_check_branch
      %229 = sbr.rel (0) target = $region17
    $region16: #{tpu_custom_call.1} parent=1 // pred_region
      %231 = dma.done [#allocation3], 256
    $region17: #{tpu_custom_call.1} parent=1 // pred_fallthru
      _
    %232 = vsyncpa [#allocation3], 1

</llo_original>
